<compile_context>
chip_gen: v5e
topology: v5e:2x2
jax: 0.10.0
libtpu: 0.0.40
codegen_flags: <defaults>
</compile_context>

<pallas_src>
import functools

import jax
import jax.numpy as jnp
from jax import lax
from jax.experimental import pallas as pl
from jax.experimental.pallas import tpu as pltpu


_SINGLE_BLOCK_MAX_ROWS = 2048   # whole batch as one block (no grid) up to here
_MAX_ROWS_PER_BLOCK = 2048      # row tile for the large-batch grid path
_MIN_ROWS_PER_BLOCK = 256       # don't shrink the row tile below this
_PRESLICE_FACTOR = 4            # pre-slice the window in the wrapper when S > 4*K


def _ar_kernel(x_ref, w_ref, b_ref, o_ref, *, input_steps):
    """out = x[:, -input_steps:] @ W^T + b.

    x_ref : [TM, S]   history block (S == input_steps when pre-sliced in wrapper)
    w_ref : [F, K]    nn.Linear weight (NOT transposed)
    b_ref : [1, F]    bias
    o_ref : [TM, F]   unpadded output block (F == future_steps)
    """
    S = x_ref.shape[1]
    # Static window slice on the VMEM ref (free when S == input_steps).
    x_win = x_ref[...] if S == input_steps else x_ref[:, S - input_steps:]
    # Contract last dims of both operands: x @ W^T without materializing W^T.
    acc = lax.dot_general(
        x_win, w_ref[...],
        dimension_numbers=(((1,), (1,)), ((), ())),
        preferred_element_type=jnp.float32)
    o_ref[...] = (acc + b_ref[...]).astype(o_ref.dtype)


@functools.partial(jax.jit, static_argnames=("input_steps",))
def ar_model_forward(x, weight, bias, input_steps):
    """x: [B, S, 1] (or [B, S]); weight: [future, input_steps]; bias: [future]."""
    # squeeze(-1): contiguous trailing unit dim -> free reshape under jit.
    x2d = x.reshape(x.shape[0], x.shape[1]) if x.ndim == 3 else x
    B, S = x2d.shape
    future, k = weight.shape
    assert k == input_steps and S >= input_steps

    # Long histories: bring only the window into VMEM (direct HBM-read reduction).
    if S > _PRESLICE_FACTOR * input_steps:
        x2d = lax.slice_in_dim(x2d, S - input_steps, S, axis=1)
        S = input_steps

    b2d = bias.reshape(1, future)   # 2-D bias for a canonical (sublane, lane) layout
    kernel = functools.partial(_ar_kernel, input_steps=input_steps)
    out_shape = jax.ShapeDtypeStruct((B, future), jnp.float32)

    if B <= _SINGLE_BLOCK_MAX_ROWS:
        # Whole problem is one small block: no grid, no pipeline scaffolding.
        return pl.pallas_call(
            kernel,
            out_shape=out_shape,
            in_specs=[pl.BlockSpec(memory_space=pltpu.MemorySpace.VMEM)] * 3,
            out_specs=pl.BlockSpec(memory_space=pltpu.MemorySpace.VMEM),
        )(x2d, weight, b2d)

    # Large batch: row-tiled grid. Keep >=4 blocks (>=2 per TensorCore on v7x).
    tm = _MAX_ROWS_PER_BLOCK
    while pl.cdiv(B, tm) < 4 and tm > _MIN_ROWS_PER_BLOCK:
        tm //= 2

    return pl.pallas_call(
        kernel,
        out_shape=out_shape,
        grid=(pl.cdiv(B, tm),),
        in_specs=[
            pl.BlockSpec((tm, S), lambda i: (i, 0)),
            pl.BlockSpec((future, input_steps), lambda i: (0, 0)),
            pl.BlockSpec((1, future), lambda i: (0, 0)),
        ],
        out_specs=pl.BlockSpec((tm, future), lambda i: (i, 0)),
        compiler_params=pltpu.CompilerParams(
            dimension_semantics=("parallel",)),
    )(x2d, weight, b2d)


if __name__ == "__main__":
    # Small shapes consistent with the module.
    batch = 8
    seq_total = 12        # total history available in x
    input_steps = 8       # window consumed by the model
    future_steps = 10     # forecast horizon

    key = jax.random.PRNGKey(0)
    kx, kw, kb = jax.random.split(key, 3)

    # Input sequence: [B, S, 1] like the PyTorch model expects.
    x = jax.random.normal(kx, (batch, seq_total, 1), dtype=jnp.float32)

    # Deterministic nn.Linear-style init: U(-1/sqrt(in), 1/sqrt(in)).
    bound = 1.0 / jnp.sqrt(jnp.float32(input_steps))
    weight = jax.random.uniform(
        kw, (future_steps, input_steps), jnp.float32, -bound, bound)
    bias = jax.random.uniform(
        kb, (future_steps,), jnp.float32, -bound, bound)

    # --- single-block (no-grid) path ---
    out = ar_model_forward(x, weight, bias, input_steps=input_steps)
    out = jax.block_until_ready(out)
    ref = x[:, -input_steps:, 0] @ weight.T + bias
    assert out.shape == (batch, future_steps)
    assert jnp.allclose(out, ref, atol=1e-5, rtol=1e-5)

    # --- grid path with B NOT a multiple of the row tile (partial last block) ---
    big_b = 2500
    xb = jax.random.normal(kx, (big_b, seq_total, 1), dtype=jnp.float32)
    out_b = ar_model_forward(xb, weight, bias, input_steps=input_steps)
    out_b = jax.block_until_ready(out_b)
    ref_b = xb[:, -input_steps:, 0] @ weight.T + bias
    assert out_b.shape == (big_b, future_steps)
    assert jnp.allclose(out_b, ref_b, atol=1e-5, rtol=1e-5)

    print("KERNEL_OK")
</pallas_src>

<mosaic_0001>
module attributes {stable_mosaic.version = 11 : i64} {
  func.func @_ar_kernel(%arg0: memref<8x12xf32, #tpu.memory_space<vmem>>, %arg1: memref<10x8xf32, #tpu.memory_space<vmem>>, %arg2: memref<1x10xf32, #tpu.memory_space<vmem>>, %arg3: memref<8x10xf32, #tpu.memory_space<vmem>>) attributes {dimension_semantics = [], scalar_prefetch = 0 : i64, scratch_operands = 0 : i64, tpu.core_type = #tpu.core_type<tc>} {
    %c0 = arith.constant 0 : index
    %c4 = arith.constant 4 : index
    %0 = vector.load %arg0[%c0, %c4] : memref<8x12xf32, #tpu.memory_space<vmem>>, vector<8x8xf32>
    %c0_0 = arith.constant 0 : index
    %c0_1 = arith.constant 0 : index
    %1 = vector.load %arg1[%c0_0, %c0_1] : memref<10x8xf32, #tpu.memory_space<vmem>>, vector<10x8xf32>
    %cst = arith.constant dense<0.000000e+00> : vector<8x10xf32>
    %2 = tpu.matmul %0, %1, %cst {dimension_numbers = #tpu.dot_dimension_numbers<[1], [1], [0], [0], [0, 0, 1, 0], [], []>} : vector<8x8xf32>, vector<10x8xf32>, vector<8x10xf32> -> vector<8x10xf32>
    %c0_2 = arith.constant 0 : index
    %c0_3 = arith.constant 0 : index
    %3 = vector.load %arg2[%c0_2, %c0_3] : memref<1x10xf32, #tpu.memory_space<vmem>>, vector<1x10xf32>
    %4 = vector.broadcast %3 : vector<1x10xf32> to vector<8x10xf32>
    %5 = arith.addf %2, %4 : vector<8x10xf32>
    %c0_4 = arith.constant 0 : index
    %c0_5 = arith.constant 0 : index
    %6 = vector.load %arg3[%c0_4, %c0_5] : memref<8x10xf32, #tpu.memory_space<vmem>>, vector<8x10xf32>
    tpu.vector_store %arg3[%c0_4, %c0_5], %5 {strides = array<i32>} : memref<8x10xf32, #tpu.memory_space<vmem>>, vector<8x10xf32>,
    return
  }
}

</mosaic_0001>

<llo_original>
// kernel: ar_model_forward.1
$region0: #{ar_model_forward.1}
  #allocation0 [shape = 'u32[]', space=smem, size = 0x4, offset = 0x4, fixed_abs, tag = 'smem constant byte address 0x4 - core index']
  #allocation1 [shape = 'u32[72,128]{1,0:T(1,128)}', space=vmem, size = 0x9000, scoped, tag = 'internal scratch']
  %s0 = inlined_call_operand.vmem [shape: f32[8,12], index: 0, kind: input, shape index: {}]
  %s1 = inlined_call_operand.vmem [shape: f32[10,8], index: 1, kind: input, shape index: {}]
  %s2 = inlined_call_operand.vmem [shape: f32[1,10], index: 2, kind: input, shape index: {}]
  %s3 = inlined_call_operand.hbm [shape: f32[8,10], index: 3, kind: output, shape index: {}]
  %s4 = sld [smem:[#allocation0]]
  $region22: #{ar_model_forward.1} parent=0
    _
  %s6 = ssub.s32 1, %s4
  %s7 = scalar_select 0, %s6, %s4
  $region1: #{ar_model_forward.1} parent=0
    #allocation2 [shape = 'u8[4096]{0}', space=vmem, size = 0x1000, scoped, tag = 'output window, operand 0, single buffered']
    #allocation3 [shape = 's32[1]{0}', space=sflag, size = 0x4, scoped, tag = 'scoped memory for ar_model_forward.1']
    %8 = vsyncpa [#allocation3], 0
    // Predicated region
    $region2: #{ar_model_forward.1} parent=1 // pred_check
      _
    $region3: #{ar_model_forward.1} parent=1 // pred_check_branch
      %10 = sbr.rel (0) target = $region5
    $region4: #{ar_model_forward.1} parent=1 // pred_region
      _
    $region5: #{ar_model_forward.1} parent=1 // pred_fallthru
      _
    // Predicated region
    $region6: #{ar_model_forward.1} parent=1 // pred_check
      _
    $region7: #{ar_model_forward.1} parent=1 // pred_check_branch
      %12 = sbr.rel (0) target = $region9
    $region8: #{ar_model_forward.1} parent=1 // pred_region
      _
    $region9: #{ar_model_forward.1} parent=1 // pred_fallthru
      _
    // Predicated region
    $region10: #{ar_model_forward.1} parent=1 // pred_check
      _
    $region11: #{ar_model_forward.1} parent=1 // pred_check_branch
      %14 = sbr.rel (0) target = $region13
    $region12: #{ar_model_forward.1} parent=1 // pred_region
      _
    $region13: #{ar_model_forward.1} parent=1 // pred_fallthru
      _
    %v15 = vld [vmem:[%s0] sm:$0xff]
    %v16 = vld [vmem:[%s1] sm:$0xff]
    %v17 = vld [vmem:[%s1 + $0x8] sm:$0x3]
    %v18 = vld [vmem:[%s2] sm:$0x1]
    %v20 = vperm.slane %v18, 0
    %23 = vrot.lane.b32.xlu0 %v15, 124
    %v24 = vpop.permute.xlu0 %23
    %vm25 = vcmask 64512
    %v26 = vsel %vm25, %v24, 0
    %v29 = vsel %vm25, %v16, 0
    %v32 = vsel %vm25, %v17, 0
    %34 = vmatpush.xpose.msra.mxu0 0.0
    %35 = vmatpush.xpose.msra.mxu0 0.0
    %36 = vmatpush.xpose.msra.mxu0 0.0
    %37 = vmatpush.xpose.msra.mxu0 0.0
    %38 = vmatpush.xpose.msra.mxu0 0.0
    %39 = vmatpush.xpose.msra.mxu0 0.0
    %40 = vmatpush.xpose.msra.mxu0 0.0
    %41 = vmatpush.xpose.msra.mxu0 0.0
    %42 = vmatpush.xpose.msra.mxu0 0.0
    %43 = vmatpush.xpose.msra.mxu0 0.0
    %44 = vmatpush.xpose.msra.mxu0 0.0
    %45 = vmatpush.xpose.msra.mxu0 0.0
    %46 = vmatpush.xpose.msra.mxu0 0.0
    %47 = vmatpush.xpose.msra.mxu0 0.0
    %48 = vmatpush.xpose.msra.mxu0 %v32
    %49 = vmatpush.xpose.msra.mxu0 %v29
    %50 = vmatmul.f32.gmra.mxu0 %v26
    %v51 = vpop.f32.mrf.mxu0
    %v52 = vadd.f32 %v20, %v51
    %53 = vdwg.mxu0
    %vm54 = vcmask 80896
    %55 = vst.msk [vmem:[#allocation2] sm:$0xff] %vm54, %v52
    // Predicated region
    $region14: #{ar_model_forward.1} parent=1 // pred_check
      _
    $region15: #{ar_model_forward.1} parent=1 // pred_check_branch
      %57 = sbr.rel (0) target = $region17
    $region16: #{ar_model_forward.1} parent=1 // pred_region
      %59 = vsyncadd [#allocation3], 0
      %s61 = sshll.u32 [#allocation2], 4
      %s62 = int_to_ptr.vmem [resolvable:$true] %s61
      %s63 = sshll.u32 %s3, 4
      %s64 = int_to_ptr.hbm [resolvable:$true] %s63
      %66 = dma.vmem_to_hbm [thread:$0]  %s62, 128, %s64, [#allocation3]
    $region17: #{ar_model_forward.1} parent=1 // pred_fallthru
      _
    // Predicated region
    $region18: #{ar_model_forward.1} parent=1 // pred_check
      _
    $region19: #{ar_model_forward.1} parent=1 // pred_check_branch
      %68 = sbr.rel (0) target = $region21
    $region20: #{ar_model_forward.1} parent=1 // pred_region
      %70 = dma.done [#allocation3], 128
    $region21: #{ar_model_forward.1} parent=1 // pred_fallthru
      _
    %71 = vsyncpa [#allocation3], 1

</llo_original>
